<compile_context>
chip_gen: v6e
topology: v6e:2x2x1
jax: 0.10.0
libtpu: 0.0.40
codegen_flags: <defaults>
</compile_context>

<pallas_src>
import functools

import jax
import jax.numpy as jnp
from jax.experimental import pallas as pl
from jax.experimental.pallas import tpu as pltpu

_LANE = 128
_SUBLANE = 8


def _round_up(x, m):
    return (x + m - 1) // m * m


def _sdpa_kernel(q_ref, k_ref, v_ref, mask_ref, out_ref, *attn_refs, scale):
    """One (batch, q-tile) grid step. Refs are 2-D (batch dim squeezed by BlockSpec)."""
    q = q_ref[...]                                   # (TQ, Dp)   native dtype
    k = k_ref[...]                                   # (Lkp, Dp)  native dtype
    v = v_ref[...]                                   # (Lkp, Dvp) native dtype
    m = mask_ref[...]                                # (TQ, Lkp)  int8, nonzero = masked

    # Q @ K^T contracting dim 1 of both operands: the K transpose is folded into the
    # MXU's rhs-transposed matmul path, no materialized XLU/VMEM transpose.
    s = jax.lax.dot_general(q, k, dimension_numbers=(((1,), (1,)), ((), ())),
                            preferred_element_type=jnp.float32)      # (TQ, Lkp) f32

    # masked_fill(mask, -inf) (applied before the temperature, as in the reference;
    # -inf / T == -inf for T > 0 so the order is immaterial).
    s = jnp.where(m != 0, -jnp.inf, s)

    # softmax(s / T) == exp((s - max(s)) * (1/T)) / sum(...) for T > 0. Applying the f32
    # scale after the max keeps 1/T exact and preserves the fully-masked-row NaN behaviour
    # of the PyTorch reference.
    s_max = jnp.max(s, axis=-1, keepdims=True)
    p = jnp.exp((s - s_max) * scale)
    denom = jnp.sum(p, axis=-1, keepdims=True)
    inv = pl.reciprocal(denom)          # exact: returned attn rows sum to 1 (mem-bound
                                        # kernel -> the exact reciprocal is effectively free)

    if attn_refs:                                    # caller wants the attention matrix
        attn = p * inv                               # single normalized f32 copy
        attn_refs[0][...] = attn.astype(attn_refs[0].dtype)
        pn = attn.astype(v.dtype)
    else:
        pn = (p * inv).astype(v.dtype)               # fused normalize + cast (one live copy)

    out = jax.lax.dot_general(pn, v, dimension_numbers=(((1,), (0,)), ((), ())),
                              preferred_element_type=jnp.float32)    # (TQ, Dvp), f32 acc
    out_ref[...] = out.astype(out_ref.dtype)


def _physical_vmem_bytes():
    """Best-effort physical VMEM query; None if unavailable."""
    try:
        return int(pltpu.get_tpu_info().vmem_capacity_bytes)
    except Exception:
        return None


def _choose_q_tile(Dp, Dvp, Lkp, q_it, k_it, v_it, o_it, a_it,
                   return_attn, kv_bufs, budget, block_q):
    """Largest q tile whose per-grid-step VMEM footprint fits the budget."""
    def est(tq):
        r = 2 * (tq * Dp * q_it + tq * Lkp * 1 + tq * Dvp * o_it)    # dbl-buffered q/mask/out
        if return_attn:
            r += 2 * tq * Lkp * a_it                                  # dbl-buffered attn tile
        r += kv_bufs * Lkp * (Dp * k_it + Dvp * v_it)                 # resident K/V blocks
        r += 4 * tq * Lkp * 4                                         # f32 (tq,Lkp) intermediates
        r += 2 * 1024 * 1024                                          # slack
        return r

    cands = [c for c in (512, 256, 128, 64, 32, 16, 8)
             if block_q is None or c <= block_q]
    if not cands:
        cands = [8]
    for c in cands:
        if est(c) <= budget:
            return c
    return cands[-1]


def scaled_dot_product_attention(q, k, v, mask, temperature, *,
                                 block_q=None, return_attn=True, attn_dtype=None):
    """q: (B, Lq, D), k: (B, Lk, D), v: (B, Lk, Dv), mask: (B, Lq, Lk) (nonzero = masked).

    Returns (output, attn) like the PyTorch module when return_attn=True, else output only.
    attn_dtype=None keeps q.dtype (PyTorch semantics); pass jnp.bfloat16 to halve the
    attention writeback stream.
    """
    assert float(temperature) > 0.0, "temperature must be > 0"
    B, Lq, D = q.shape
    _, Lk, Dv = v.shape
    assert k.shape == (B, Lk, D)
    assert mask.shape == (B, Lq, Lk)

    attn_dtype = q.dtype if attn_dtype is None else jnp.dtype(attn_dtype)
    mask = mask.astype(jnp.int8)                       # smallest possible mask HBM stream

    # Lane-dense padding targets.
    Dp = _round_up(D, _LANE)
    Dvp = _round_up(Dv, _LANE)
    Lkp = _round_up(Lk, _LANE)

    # Per-generation VMEM budget & K/V buffering.
    phys = _physical_vmem_bytes()
    if phys is None:
        budget = 48 * 1024 * 1024       # conservative: safe even on v7x's 64 MiB VMEM
        kv_bufs = 2
    else:
        budget = (3 * phys) // 4        # ~96 MiB on v5e/v6e (128 MiB), ~48 MiB on v7x (64 MiB)
        # v7x (64 MiB VMEM): single-buffer K/V; their block index only changes per batch.
        kv_bufs = 1 if phys <= 64 * 1024 * 1024 else 2

    tq = _choose_q_tile(Dp, Dvp, Lkp,
                        q.dtype.itemsize, k.dtype.itemsize, v.dtype.itemsize,
                        q.dtype.itemsize, jnp.dtype(attn_dtype).itemsize,
                        return_attn, kv_bufs, budget, block_q)
    tq = min(tq, _round_up(Lq, _SUBLANE))
    lq_pad = _round_up(Lq, tq)

    # Zero-pad operands; padded keys are masked, padded queries are left unmasked (their
    # rows are garbage-but-finite and sliced off below).
    if (lq_pad, Dp) != (Lq, D):
        q = jnp.pad(q, ((0, 0), (0, lq_pad - Lq), (0, Dp - D)))
    if (Lkp, Dp) != (Lk, D):
        k = jnp.pad(k, ((0, 0), (0, Lkp - Lk), (0, Dp - D)))
    if (Lkp, Dvp) != (Lk, Dv):
        v = jnp.pad(v, ((0, 0), (0, Lkp - Lk), (0, Dvp - Dv)))
    if Lkp != Lk:
        mask = jnp.pad(mask, ((0, 0), (0, 0), (0, Lkp - Lk)), constant_values=1)
    if lq_pad != Lq:
        mask = jnp.pad(mask, ((0, 0), (0, lq_pad - Lq), (0, 0)))

    kernel = functools.partial(_sdpa_kernel, scale=1.0 / float(temperature))
    grid = (B, lq_pad // tq)   # batch outer: K/V block index is constant within a batch

    kv_kwargs = dict(pipeline_mode=pl.Buffered(1)) if kv_bufs == 1 else {}
    in_specs = [
        pl.BlockSpec((None, tq, Dp), lambda b, i: (b, i, 0)),                 # q tile
        pl.BlockSpec((None, Lkp, Dp), lambda b, i: (b, 0, 0), **kv_kwargs),   # full K per batch
        pl.BlockSpec((None, Lkp, Dvp), lambda b, i: (b, 0, 0), **kv_kwargs),  # full V per batch
        pl.BlockSpec((None, tq, Lkp), lambda b, i: (b, i, 0)),                # mask tile (int8)
    ]
    out_spec = pl.BlockSpec((None, tq, Dvp), lambda b, i: (b, i, 0))
    out_struct = jax.ShapeDtypeStruct((B, lq_pad, Dvp), q.dtype)
    if return_attn:
        out_shape = (out_struct, jax.ShapeDtypeStruct((B, lq_pad, Lkp), attn_dtype))
        out_specs = (out_spec, pl.BlockSpec((None, tq, Lkp), lambda b, i: (b, i, 0)))
    else:
        out_shape = out_struct
        out_specs = out_spec

    result = pl.pallas_call(
        kernel,
        out_shape=out_shape,
        grid=grid,
        in_specs=in_specs,
        out_specs=out_specs,
        compiler_params=pltpu.CompilerParams(
            dimension_semantics=("parallel", "parallel"),
            vmem_limit_bytes=int(budget),
        ),
    )(q, k, v, mask)

    if return_attn:
        out, attn = result
        return out[:, :Lq, :Dv], attn[:, :Lq, :Lk]
    return result[:, :Lq, :Dv]


def _reference(q, k, v, mask, temperature):
    """Pure-JAX reference mirroring the PyTorch forward."""
    s = jnp.einsum("bqd,bkd->bqk", q.astype(jnp.float32), k.astype(jnp.float32))
    s = jnp.where(mask != 0, -jnp.inf, s) / jnp.float32(temperature)
    attn = jax.nn.softmax(s, axis=2)
    out = jnp.einsum("bqk,bkd->bqd", attn, v.astype(jnp.float32))
    return out, attn


def _make_inputs(key, B, Lq, Lk, D, Dv, dtype=jnp.float32):
    kq, kk, kv, km = jax.random.split(key, 4)
    q = jax.random.normal(kq, (B, Lq, D), dtype=dtype)
    k = jax.random.normal(kk, (B, Lk, D), dtype=dtype)
    v = jax.random.normal(kv, (B, Lk, Dv), dtype=dtype)
    # Boolean mask (True = masked out). Keep key 0 unmasked so no row is fully masked
    # (a fully masked row yields NaN, matching the PyTorch reference).
    mask_bool = jax.random.bernoulli(km, p=0.3, shape=(B, Lq, Lk))
    mask_bool = mask_bool.at[:, :, 0].set(False)
    return q, k, v, mask_bool.astype(jnp.int32)


if __name__ == "__main__":
    key = jax.random.PRNGKey(0)
    k0, k1 = jax.random.split(key, 2)

    # Case 1: small shapes consistent with the TTS module (single q tile per batch element).
    B, Lq, Lk, D, Dv = 2, 8, 8, 32, 32
    temperature = float(D) ** 0.5
    q, k, v, mask = _make_inputs(k0, B, Lq, Lk, D, Dv)

    out, attn = scaled_dot_product_attention(q, k, v, mask, temperature)
    out, attn = jax.block_until_ready((out, attn))

    out_ref, attn_ref = _reference(q, k, v, mask, temperature)
    assert out.shape == out_ref.shape and attn.shape == attn_ref.shape
    assert jnp.allclose(out, out_ref, atol=2e-3, rtol=2e-3), "output mismatch (case 1)"
    assert jnp.allclose(attn, attn_ref, atol=2e-3, rtol=2e-3), "attn mismatch (case 1)"

    # Case 2: exercises D/Dv/Lk lane padding, Lq padding, and the multi-q-tile pipeline.
    B2, Lq2, Lk2, D2, Dv2 = 2, 200, 72, 40, 24
    temperature2 = float(D2) ** 0.5
    q2, k2, v2, mask2 = _make_inputs(k1, B2, Lq2, Lk2, D2, Dv2)

    out2, attn2 = scaled_dot_product_attention(q2, k2, v2, mask2, temperature2, block_q=128)
    out2, attn2 = jax.block_until_ready((out2, attn2))

    out2_ref, attn2_ref = _reference(q2, k2, v2, mask2, temperature2)
    assert out2.shape == out2_ref.shape and attn2.shape == attn2_ref.shape
    assert jnp.allclose(out2, out2_ref, atol=2e-3, rtol=2e-3), "output mismatch (case 2)"
    assert jnp.allclose(attn2, attn2_ref, atol=2e-3, rtol=2e-3), "attn mismatch (case 2)"

    # Case 3: output-only path (the (B, Lq, Lk) attention writeback stream is skipped).
    out3 = scaled_dot_product_attention(q2, k2, v2, mask2, temperature2,
                                        block_q=128, return_attn=False)
    out3 = jax.block_until_ready(out3)
    assert jnp.allclose(out3, out2_ref, atol=2e-3, rtol=2e-3), "output mismatch (case 3)"

    print("KERNEL_OK")
</pallas_src>

<mosaic_0001>
module attributes {stable_mosaic.version = 11 : i64} {
  func.func @_sdpa_kernel(%arg0: i32, %arg1: i32, %arg2: memref<1x8x128xf32, #tpu.memory_space<vmem>>, %arg3: memref<1x128x128xf32, #tpu.memory_space<vmem>>, %arg4: memref<1x128x128xf32, #tpu.memory_space<vmem>>, %arg5: memref<1x8x128xi8, #tpu.memory_space<vmem>>, %arg6: memref<1x8x128xf32, #tpu.memory_space<vmem>>, %arg7: memref<1x8x128xf32, #tpu.memory_space<vmem>>) attributes {dimension_semantics = [#tpu.dimension_semantics<parallel>, #tpu.dimension_semantics<parallel>], iteration_bounds = array<i64: 2, 1>, scalar_prefetch = 0 : i64, scratch_operands = 0 : i64, tpu.core_type = #tpu.core_type<tc>, window_params = [{transform_indices = @transform_0, window_bounds = array<i64: 1, 8, 128>}, {transform_indices = @transform_1, window_bounds = array<i64: 1, 128, 128>}, {transform_indices = @transform_2, window_bounds = array<i64: 1, 128, 128>}, {transform_indices = @transform_3, window_bounds = array<i64: 1, 8, 128>}, {transform_indices = @transform_4, window_bounds = array<i64: 1, 8, 128>}, {transform_indices = @transform_5, window_bounds = array<i64: 1, 8, 128>}]} {
    %c0 = arith.constant 0 : index
    %c0_0 = arith.constant 0 : index
    %c0_1 = arith.constant 0 : index
    %0 = vector.load %arg2[%c0, %c0_0, %c0_1] : memref<1x8x128xf32, #tpu.memory_space<vmem>>, vector<1x8x128xf32>
    %1 = vector.shape_cast %0 : vector<1x8x128xf32> to vector<8x128xf32>
    %c0_2 = arith.constant 0 : index
    %c0_3 = arith.constant 0 : index
    %c0_4 = arith.constant 0 : index
    %2 = vector.load %arg3[%c0_2, %c0_3, %c0_4] : memref<1x128x128xf32, #tpu.memory_space<vmem>>, vector<1x128x128xf32>
    %3 = vector.shape_cast %2 : vector<1x128x128xf32> to vector<128x128xf32>
    %c0_5 = arith.constant 0 : index
    %c0_6 = arith.constant 0 : index
    %c0_7 = arith.constant 0 : index
    %4 = vector.load %arg4[%c0_5, %c0_6, %c0_7] : memref<1x128x128xf32, #tpu.memory_space<vmem>>, vector<1x128x128xf32>
    %5 = vector.shape_cast %4 : vector<1x128x128xf32> to vector<128x128xf32>
    %c0_8 = arith.constant 0 : index
    %c0_9 = arith.constant 0 : index
    %c0_10 = arith.constant 0 : index
    %6 = vector.load %arg5[%c0_8, %c0_9, %c0_10] : memref<1x8x128xi8, #tpu.memory_space<vmem>>, vector<1x8x128xi8>
    %7 = vector.shape_cast %6 : vector<1x8x128xi8> to vector<8x128xi8>
    %cst = arith.constant dense<0.000000e+00> : vector<8x128xf32>
    %8 = tpu.matmul %1, %3, %cst {dimension_numbers = #tpu.dot_dimension_numbers<[1], [1], [0], [0], [0, 0, 1, 0], [], []>} : vector<8x128xf32>, vector<128x128xf32>, vector<8x128xf32> -> vector<8x128xf32>
    %c0_i8 = arith.constant 0 : i8
    %9 = vector.broadcast %c0_i8 : i8 to vector<8x128xi8>
    %10 = arith.cmpi ne, %7, %9 : vector<8x128xi8>
    %cst_11 = arith.constant 0xFF800000 : f32
    %11 = vector.broadcast %cst_11 : f32 to vector<8x128xf32>
    %12 = arith.select %10, %11, %8 : vector<8x128xi1>, vector<8x128xf32>
    %cst_12 = arith.constant dense<0xFF800000> : vector<8xf32>
    %13 = vector.multi_reduction <maximumf>, %12, %cst_12 [1] : vector<8x128xf32> to vector<8xf32>
    %14 = vector.shape_cast %13 : vector<8xf32> to vector<8x1xf32>
    %15 = vector.broadcast %14 : vector<8x1xf32> to vector<8x128xf32>
    %16 = arith.subf %12, %15 : vector<8x128xf32>
    %cst_13 = arith.constant 0.176776692 : f32
    %17 = vector.broadcast %cst_13 : f32 to vector<8x128xf32>
    %18 = arith.mulf %16, %17 : vector<8x128xf32>
    %19 = math.exp %18 : vector<8x128xf32>
    %cst_14 = arith.constant dense<0.000000e+00> : vector<8xf32>
    %20 = vector.multi_reduction <add>, %19, %cst_14 [1] : vector<8x128xf32> to vector<8xf32>
    %21 = vector.shape_cast %20 : vector<8xf32> to vector<8x1xf32>
    %22 = tpu.reciprocal %21 : vector<8x1xf32> -> vector<8x1xf32>
    %23 = vector.broadcast %22 : vector<8x1xf32> to vector<8x128xf32>
    %24 = arith.mulf %19, %23 : vector<8x128xf32>
    %c0_15 = arith.constant 0 : index
    %c0_16 = arith.constant 0 : index
    %c0_17 = arith.constant 0 : index
    %25 = vector.load %arg7[%c0_15, %c0_16, %c0_17] : memref<1x8x128xf32, #tpu.memory_space<vmem>>, vector<1x8x128xf32>
    %26 = vector.shape_cast %25 : vector<1x8x128xf32> to vector<8x128xf32>
    %27 = vector.shape_cast %24 : vector<8x128xf32> to vector<1x8x128xf32>
    tpu.vector_store %arg7[%c0_15, %c0_16, %c0_17], %27 {strides = array<i32>} : memref<1x8x128xf32, #tpu.memory_space<vmem>>, vector<1x8x128xf32>,
    %cst_18 = arith.constant dense<0.000000e+00> : vector<8x128xf32>
    %28 = tpu.matmul %24, %5, %cst_18 {dimension_numbers = #tpu.dot_dimension_numbers<[1], [0], [0], [1], [0, 0, 1, 1], [], []>} : vector<8x128xf32>, vector<128x128xf32>, vector<8x128xf32> -> vector<8x128xf32>
    %c0_19 = arith.constant 0 : index
    %c0_20 = arith.constant 0 : index
    %c0_21 = arith.constant 0 : index
    %29 = vector.load %arg6[%c0_19, %c0_20, %c0_21] : memref<1x8x128xf32, #tpu.memory_space<vmem>>, vector<1x8x128xf32>
    %30 = vector.shape_cast %29 : vector<1x8x128xf32> to vector<8x128xf32>
    %31 = vector.shape_cast %28 : vector<8x128xf32> to vector<1x8x128xf32>
    tpu.vector_store %arg6[%c0_19, %c0_20, %c0_21], %31 {strides = array<i32>} : memref<1x8x128xf32, #tpu.memory_space<vmem>>, vector<1x8x128xf32>,
    return
  }
  func.func @transform_0(%arg0: i32, %arg1: i32) -> (i32, i32, i32) {
    %c0_i32 = arith.constant 0 : i32
    %c0_i32_0 = arith.constant 0 : i32
    return %arg0, %arg1, %c0_i32 : i32, i32, i32
  }
  func.func @transform_1(%arg0: i32, %arg1: i32) -> (i32, i32, i32) {
    %c0_i32 = arith.constant 0 : i32
    %c0_i32_0 = arith.constant 0 : i32
    %c0_i32_1 = arith.constant 0 : i32
    return %arg0, %c0_i32, %c0_i32_0 : i32, i32, i32
  }
  func.func @transform_2(%arg0: i32, %arg1: i32) -> (i32, i32, i32) {
    %c0_i32 = arith.constant 0 : i32
    %c0_i32_0 = arith.constant 0 : i32
    %c0_i32_1 = arith.constant 0 : i32
    return %arg0, %c0_i32, %c0_i32_0 : i32, i32, i32
  }
  func.func @transform_3(%arg0: i32, %arg1: i32) -> (i32, i32, i32) {
    %c0_i32 = arith.constant 0 : i32
    %c0_i32_0 = arith.constant 0 : i32
    return %arg0, %arg1, %c0_i32 : i32, i32, i32
  }
  func.func @transform_4(%arg0: i32, %arg1: i32) -> (i32, i32, i32) {
    %c0_i32 = arith.constant 0 : i32
    %c0_i32_0 = arith.constant 0 : i32
    return %arg0, %arg1, %c0_i32 : i32, i32, i32
  }
  func.func @transform_5(%arg0: i32, %arg1: i32) -> (i32, i32, i32) {
    %c0_i32 = arith.constant 0 : i32
    %c0_i32_0 = arith.constant 0 : i32
    return %arg0, %arg1, %c0_i32 : i32, i32, i32
  }
}

</mosaic_0001>

<llo_original>
// kernel: tpu_custom_call.1
$region0: #{tpu_custom_call.1}
  #allocation0 [shape = 'u32[]', space=smem, size = 0x4, offset = 0x4, fixed_abs, tag = 'smem constant byte address 0x4 - core index']
  #allocation1 [shape = 'u32[144,128]{1,0:T(1,128)}', space=vmem, size = 0x12000, scoped, tag = 'internal scratch']
  %s0 = inlined_call_operand.hbm [shape: f32[2,8,128], index: 0, kind: input, shape index: {}]
  %s1 = inlined_call_operand.hbm [shape: f32[2,128,128], index: 1, kind: input, shape index: {}]
  %s2 = inlined_call_operand.hbm [shape: f32[2,128,128], index: 2, kind: input, shape index: {}]
  %s3 = inlined_call_operand.vmem [shape: s8[2,8,128], index: 3, kind: input, shape index: {}]
  %s4 = inlined_call_operand.hbm [shape: f32[2,8,128], index: 4, kind: output, shape index: {0}]
  %s5 = inlined_call_operand.hbm [shape: f32[2,8,128], index: 5, kind: output, shape index: {1}]
  %6 = xla_tuple %s4, %s5
  %s7 = sld [smem:[#allocation0]]
  $region69: #{tpu_custom_call.1} parent=0
    _
  %s9 = ssub.s32 1, %s7
  %s10 = scalar_select 0, %s9, %s7
  $region1: #{tpu_custom_call.1} parent=0
    #allocation2 [shape = 'u8[8192]{0}', space=vmem, size = 0x2000, scoped, tag = 'input window, operand 0']
    #allocation3 [shape = 's32[2]{0}', space=sflag, size = 0x8, scoped, tag = 'scoped memory for tpu_custom_call.1']
    #allocation4 [shape = 's32[2]{0}', space=sflag, size = 0x8, scoped, tag = 'scoped memory for tpu_custom_call.1']
    #allocation5 [shape = 'u8[131072]{0}', space=vmem, size = 0x20000, scoped, tag = 'input window, operand 1']
    #allocation6 [shape = 's32[2]{0}', space=sflag, size = 0x8, scoped, tag = 'scoped memory for tpu_custom_call.1']
    #allocation7 [shape = 'u8[131072]{0}', space=vmem, size = 0x20000, scoped, tag = 'input window, operand 2']
    #allocation8 [shape = 'u8[8192]{0}', space=vmem, size = 0x2000, scoped, tag = 'output window, operand 0']
    #allocation9 [shape = 'u8[8192]{0}', space=vmem, size = 0x2000, scoped, tag = 'output window, operand 1']
    #allocation10 [shape = 's32[2]{0}', space=sflag, size = 0x8, scoped, tag = 'scoped memory for tpu_custom_call.1']
    %11 = vsyncpa [#allocation3], 0
    %s12 = scalar_lea.sflag [#allocation3], 1
    %13 = vsyncpa %s12, 0
    %14 = vsyncpa [#allocation6], 0
    %s15 = scalar_lea.sflag [#allocation6], 1
    %16 = vsyncpa %s15, 0
    %17 = vsyncpa [#allocation4], 0
    %s18 = scalar_lea.sflag [#allocation4], 1
    %19 = vsyncpa %s18, 0
    %20 = vsyncpa [#allocation10], 0
    %s21 = scalar_lea.sflag [#allocation10], 1
    %22 = vsyncpa %s21, 0
    loop: start=0, step=1, limit=4
    $region2: #{tpu_custom_call.1} parent=1 // loop_pre_header
      _
    $region3: #{tpu_custom_call.1} parent=1 // loop_header
      %s24 = sphi 0, %s28
      %p25 = scmp.ge.s32.totalorder %s24, 4
      %s31 = sphi 0, %s43
      %s32 = sphi 0, %s39
      %s33 = sphi 0, %s31
      %s34 = sphi 0, %s32
      %s35 = sphi 0, %s33
      %s36 = sphi 0, %s34
      %s48 = sphi 0, %s50
      %s51 = sphi 0, %s48
      %s52 = sphi 0, %s51
      %s68 = sphi 0, %s52
      %s74 = sphi 0, %s76
      %s77 = sphi 0, %s74
      %s78 = sphi 0, %s77
      %s94 = sphi 0, %s78
      %s100 = sphi 0, %s102
      %s103 = sphi 0, %s100
      %s104 = sphi 0, %s103
      %s120 = sphi 0, %s104
      %s128 = sphi 0, %s130
      %s131 = sphi 0, %s128
      %s132 = sphi 0, %s131
      %s148 = sphi 0, %s132
      %s156 = sphi 0, %s158
      %s159 = sphi 0, %s156
      %s160 = sphi 0, %s159
      %s176 = sphi 0, %s160
      %s184 = sphi 0, %s186
      %s187 = sphi 0, %s184
      %s188 = sphi 0, %s187
      %s204 = sphi 0, %s188
    $region4: #{tpu_custom_call.1} parent=1 // loop_header_branch
      %27 = sbr.rel (%p25) target = $region8
    $region5: #{tpu_custom_call.1} parent=1 // loop_body
      %s29 = ssub.s32 %s24, 1
      %s30 = ssub.s32 %s24, 2
      %s37 = sadd.s32 1, %s32
      %p38 = scmp.ge.s32.totalorder %s37, 1
      %s39 = scalar_select %p38, 0, %s37
      %s40 = sadd.s32 1, %s31
      %s41 = scalar_select %p38, %s40, %s31
      %p42 = scmp.ge.s32.totalorder %s41, 2
      %s43 = scalar_select %p42, 0, %s41
      %s44 = ssub.s32 %s31, %s43
      %s45 = ssub.s32 %s32, %s39
      %s46 = sor.u32 %s44, %s45
      %p47 = scmp.eq.s32.totalorder %s46, 0
      %s49 = sadd.s32 %s48, 1
      %s50 = scalar_select %p47, %s48, %s49
      %p53 = pneg %p47
      %p54 = scmp.eq.s32.totalorder %s24, 1
      %p55 = por %p53, %p54
      %p56 = scmp.ne.s32.totalorder %s48, %s51
      %p57 = scmp.eq.s32.totalorder %s24, 0
      %p58 = por %p56, %p57
      %p59 = scmp.ne.s32.totalorder %s48, %s51
      %p60 = scmp.eq.s32.totalorder %s29, 1
      %p61 = por %p59, %p60
      %p62 = scmp.ne.s32.totalorder %s51, %s52
      %p63 = scmp.eq.s32.totalorder %s29, 0
      %p64 = por %p62, %p63
      %p65 = scmp.ne.s32.totalorder %s51, %s52
      %p66 = scmp.eq.s32.totalorder %s30, 1
      %p67 = por %p65, %p66
      %p69 = scmp.ne.s32.totalorder %s52, %s68
      %p70 = scmp.eq.s32.totalorder %s30, 0
      %p71 = por %p69, %p70
      %s72 = ssub.s32 %s31, %s43
      %p73 = scmp.eq.s32.totalorder %s72, 0
      %s75 = sadd.s32 %s74, 1
      %s76 = scalar_select %p73, %s74, %s75
      %p79 = pneg %p73
      %p80 = scmp.eq.s32.totalorder %s24, 1
      %p81 = por %p79, %p80
      %p82 = scmp.ne.s32.totalorder %s74, %s77
      %p83 = scmp.eq.s32.totalorder %s24, 0
      %p84 = por %p82, %p83
      %p85 = scmp.ne.s32.totalorder %s74, %s77
      %p86 = scmp.eq.s32.totalorder %s29, 1
      %p87 = por %p85, %p86
      %p88 = scmp.ne.s32.totalorder %s77, %s78
      %p89 = scmp.eq.s32.totalorder %s29, 0
      %p90 = por %p88, %p89
      %p91 = scmp.ne.s32.totalorder %s77, %s78
      %p92 = scmp.eq.s32.totalorder %s30, 1
      %p93 = por %p91, %p92
      %p95 = scmp.ne.s32.totalorder %s78, %s94
      %p96 = scmp.eq.s32.totalorder %s30, 0
      %p97 = por %p95, %p96
      %s98 = ssub.s32 %s31, %s43
      %p99 = scmp.eq.s32.totalorder %s98, 0
      %s101 = sadd.s32 %s100, 1
      %s102 = scalar_select %p99, %s100, %s101
      %p105 = pneg %p99
      %p106 = scmp.eq.s32.totalorder %s24, 1
      %p107 = por %p105, %p106
      %p108 = scmp.ne.s32.totalorder %s100, %s103
      %p109 = scmp.eq.s32.totalorder %s24, 0
      %p110 = por %p108, %p109
      %p111 = scmp.ne.s32.totalorder %s100, %s103
      %p112 = scmp.eq.s32.totalorder %s29, 1
      %p113 = por %p111, %p112
      %p114 = scmp.ne.s32.totalorder %s103, %s104
      %p115 = scmp.eq.s32.totalorder %s29, 0
      %p116 = por %p114, %p115
      %p117 = scmp.ne.s32.totalorder %s103, %s104
      %p118 = scmp.eq.s32.totalorder %s30, 1
      %p119 = por %p117, %p118
      %p121 = scmp.ne.s32.totalorder %s104, %s120
      %p122 = scmp.eq.s32.totalorder %s30, 0
      %p123 = por %p121, %p122
      %s124 = ssub.s32 %s31, %s43
      %s125 = ssub.s32 %s32, %s39
      %s126 = sor.u32 %s124, %s125
      %p127 = scmp.eq.s32.totalorder %s126, 0
      %s129 = sadd.s32 %s128, 1
      %s130 = scalar_select %p127, %s128, %s129
      %p133 = pneg %p127
      %p134 = scmp.eq.s32.totalorder %s24, 1
      %p135 = por %p133, %p134
      %p136 = scmp.ne.s32.totalorder %s128, %s131
      %p137 = scmp.eq.s32.totalorder %s24, 0
      %p138 = por %p136, %p137
      %p139 = scmp.ne.s32.totalorder %s128, %s131
      %p140 = scmp.eq.s32.totalorder %s29, 1
      %p141 = por %p139, %p140
      %p142 = scmp.ne.s32.totalorder %s131, %s132
      %p143 = scmp.eq.s32.totalorder %s29, 0
      %p144 = por %p142, %p143
      %p145 = scmp.ne.s32.totalorder %s131, %s132
      %p146 = scmp.eq.s32.totalorder %s30, 1
      %p147 = por %p145, %p146
      %p149 = scmp.ne.s32.totalorder %s132, %s148
      %p150 = scmp.eq.s32.totalorder %s30, 0
      %p151 = por %p149, %p150
      %s152 = ssub.s32 %s31, %s43
      %s153 = ssub.s32 %s32, %s39
      %s154 = sor.u32 %s152, %s153
      %p155 = scmp.eq.s32.totalorder %s154, 0
      %s157 = sadd.s32 %s156, 1
      %s158 = scalar_select %p155, %s156, %s157
      %p161 = pneg %p155
      %p162 = scmp.eq.s32.totalorder %s24, 1
      %p163 = por %p161, %p162
      %p164 = scmp.ne.s32.totalorder %s156, %s159
      %p165 = scmp.eq.s32.totalorder %s24, 0
      %p166 = por %p164, %p165
      %p167 = scmp.ne.s32.totalorder %s156, %s159
      %p168 = scmp.eq.s32.totalorder %s29, 1
      %p169 = por %p167, %p168
      %p170 = scmp.ne.s32.totalorder %s159, %s160
      %p171 = scmp.eq.s32.totalorder %s29, 0
      %p172 = por %p170, %p171
      %p173 = scmp.ne.s32.totalorder %s159, %s160
      %p174 = scmp.eq.s32.totalorder %s30, 1
      %p175 = por %p173, %p174
      %p177 = scmp.ne.s32.totalorder %s160, %s176
      %p178 = scmp.eq.s32.totalorder %s30, 0
      %p179 = por %p177, %p178
      %s180 = ssub.s32 %s31, %s43
      %s181 = ssub.s32 %s32, %s39
      %s182 = sor.u32 %s180, %s181
      %p183 = scmp.eq.s32.totalorder %s182, 0
      %s185 = sadd.s32 %s184, 1
      %s186 = scalar_select %p183, %s184, %s185
      %p189 = pneg %p183
      %p190 = scmp.eq.s32.totalorder %s24, 1
      %p191 = por %p189, %p190
      %p192 = scmp.ne.s32.totalorder %s184, %s187
      %p193 = scmp.eq.s32.totalorder %s24, 0
      %p194 = por %p192, %p193
      %p195 = scmp.ne.s32.totalorder %s184, %s187
      %p196 = scmp.eq.s32.totalorder %s29, 1
      %p197 = por %p195, %p196
      %p198 = scmp.ne.s32.totalorder %s187, %s188
      %p199 = scmp.eq.s32.totalorder %s29, 0
      %p200 = por %p198, %p199
      %p201 = scmp.ne.s32.totalorder %s187, %s188
      %p202 = scmp.eq.s32.totalorder %s30, 1
      %p203 = por %p201, %p202
      %p205 = scmp.ne.s32.totalorder %s188, %s204
      %p206 = scmp.eq.s32.totalorder %s30, 0
      %p207 = por %p205, %p206
      %p208 = scmp.le.s32.totalorder 1, %s24
      %p209 = scmp.lt.s32.totalorder %s24, 3
      %p210 = pnand %p208, %p209
      %p211 = pneg %p210
      // Predicated region
      $region9: #{tpu_custom_call.1} parent=5 // pred_check
        _
      $region10: #{tpu_custom_call.1} parent=5 // pred_check_branch
        %213 = sbr.rel (%p210) target = $region12
      $region11: #{tpu_custom_call.1} parent=5 // pred_region
        %s214 = ssub.s32 %s24, 1
      $region12: #{tpu_custom_call.1} parent=5 // pred_fallthru
        _
      %p215 = scmp.lt.s32.totalorder %s24, 2
      // Predicated region
      $region13: #{tpu_custom_call.1} parent=5 // pred_check
        %p216 = pneg %p215
      $region14: #{tpu_custom_call.1} parent=5 // pred_check_branch
        %218 = sbr.rel (%p216) target = $region16
      $region15: #{tpu_custom_call.1} parent=5 // pred_region
        // Predicated region
        $region17: #{tpu_custom_call.1} parent=15 // pred_check
          %p219 = pneg %p58
        $region18: #{tpu_custom_call.1} parent=15 // pred_check_branch
          %221 = sbr.rel (%p219) target = $region20
        $region19: #{tpu_custom_call.1} parent=15 // pred_region
          %s222 = sand.u32 %s48, 1
          %s223 = scalar_lea.sflag [#allocation3], %s222
          %s224 = sand.u32 %s48, 1
          %s225 = smul.addr %s224, 8
          %s226 = scalar_lea.vmem [#allocation2], %s225
          %s228 = ssub.s32 128, 128
          %229 = vsyncadd %s223, %s228
          %s230 = sadd.s32 %s32, %s31
          %s231 = smul.addr %s230, 128
          %s232 = scalar_lea.hbm %s0, %s231
          %s234 = sshll.u32 %s226, 4
          %s235 = int_to_ptr.vmem [resolvable:$true] %s234
          %237 = dma.hbm_to_vmem [thread:$0]  %s232, 128, %s235, %s223
        $region20: #{tpu_custom_call.1} parent=15 // pred_fallthru
          _
        // Predicated region
        $region21: #{tpu_custom_call.1} parent=15 // pred_check
          %p238 = pneg %p84
        $region22: #{tpu_custom_call.1} parent=15 // pred_check_branch
          %240 = sbr.rel (%p238) target = $region24
        $region23: #{tpu_custom_call.1} parent=15 // pred_region
          %s241 = sand.u32 %s24, 1
          %s242 = scalar_lea.sflag [#allocation6], %s241
          %s243 = sand.u32 %s74, 1
          %s244 = smul.addr %s243, 128
          %s245 = scalar_lea.vmem [#allocation5], %s244
          %s247 = ssub.s32 2048, 2048
          %248 = vsyncadd %s242, %s247
          %s249 = smul.addr %s31, 16
          %s250 = smul.addr %s249, 128
          %s251 = scalar_lea.hbm %s1, %s250
          %s252 = sshll.u32 %s245, 4
          %s253 = int_to_ptr.vmem [resolvable:$true] %s252
          %258 = dma.hbm_to_vmem [thread:$0]  %s251, 2048, %s253, %s242, 128, 128, 8
        $region24: #{tpu_custom_call.1} parent=15 // pred_fallthru
          _
        // Predicated region
        $region25: #{tpu_custom_call.1} parent=15 // pred_check
          %p259 = pneg %p110
        $region26: #{tpu_custom_call.1} parent=15 // pred_check_branch
          %261 = sbr.rel (%p259) target = $region28
        $region27: #{tpu_custom_call.1} parent=15 // pred_region
          %s262 = sand.u32 %s24, 1
          %s263 = scalar_lea.sflag [#allocation6], %s262
          %s264 = sand.u32 %s100, 1
          %s265 = smul.addr %s264, 128
          %s266 = scalar_lea.vmem [#allocation7], %s265
          %s268 = ssub.s32 2048, 2048
          %269 = vsyncadd %s263, %s268
          %s270 = smul.addr %s31, 16
          %s271 = smul.addr %s270, 128
          %s272 = scalar_lea.hbm %s2, %s271
          %s273 = sshll.u32 %s266, 4
          %s274 = int_to_ptr.vmem [resolvable:$true] %s273
          %279 = dma.hbm_to_vmem [thread:$0]  %s272, 2048, %s274, %s263, 128, 128, 8
        $region28: #{tpu_custom_call.1} parent=15 // pred_fallthru
          _
        // Predicated region
        $region29: #{tpu_custom_call.1} parent=15 // pred_check
          %p280 = pneg %p138
        $region30: #{tpu_custom_call.1} parent=15 // pred_check_branch
          %282 = sbr.rel (%p280) target = $region32
        $region31: #{tpu_custom_call.1} parent=15 // pred_region
          %p283 = scmp.lt.s32.totalorder %s31, 1
          %s284 = scalar_select %p283, %s31, 1
          %p285 = scmp.lt.s32.totalorder %s32, 0
          %s286 = scalar_select %p285, %s32, 0
          %s287 = sadd.s32 %s286, %s284
          %s288 = smul.addr %s287, 2
          %s289 = scalar_lea.vmem %s3, %s288
        $region32: #{tpu_custom_call.1} parent=15 // pred_fallthru
          _
      $region16: #{tpu_custom_call.1} parent=5 // pred_fallthru
        _
      %p290 = scmp.le.s32.totalorder 1, %s24
      %p291 = scmp.lt.s32.totalorder %s24, 3
      %p292 = pnand %p290, %p291
      %p293 = pneg %p292
      // Predicated region
      $region33: #{tpu_custom_call.1} parent=5 // pred_check
        _
      $region34: #{tpu_custom_call.1} parent=5 // pred_check_branch
        %295 = sbr.rel (%p292) target = $region36
      $region35: #{tpu_custom_call.1} parent=5 // pred_region
        %s296 = ssub.s32 %s24, 1
        %s297 = sand.u32 %s51, 1
        %s298 = scalar_lea.sflag [#allocation3], %s297
        %s299 = sand.u32 %s51, 1
        %s300 = smul.addr %s299, 8
        %s301 = scalar_lea.vmem [#allocation2], %s300
        // Predicated region
        $region37: #{tpu_custom_call.1} parent=35 // pred_check
          %p302 = pneg %p64
        $region38: #{tpu_custom_call.1} parent=35 // pred_check_branch
          %304 = sbr.rel (%p302) target = $region40
        $region39: #{tpu_custom_call.1} parent=35 // pred_region
          %305 = dma.done %s298, 128
        $region40: #{tpu_custom_call.1} parent=35 // pred_fallthru
          _
        %s306 = sand.u32 %s29, 1
        %s307 = scalar_lea.sflag [#allocation6], %s306
        %s308 = sand.u32 %s77, 1
        %s309 = smul.addr %s308, 128
        %s310 = scalar_lea.vmem [#allocation5], %s309
        // Predicated region
        $region41: #{tpu_custom_call.1} parent=35 // pred_check
          %p311 = pneg %p90
        $region42: #{tpu_custom_call.1} parent=35 // pred_check_branch
          %313 = sbr.rel (%p311) target = $region44
        $region43: #{tpu_custom_call.1} parent=35 // pred_region
          %314 = dma.done %s307, 2048
        $region44: #{tpu_custom_call.1} parent=35 // pred_fallthru
          _
        %s315 = sand.u32 %s29, 1
        %s316 = scalar_lea.sflag [#allocation6], %s315
        %s317 = sand.u32 %s103, 1
        %s318 = smul.addr %s317, 128
        %s319 = scalar_lea.vmem [#allocation7], %s318
        // Predicated region
        $region45: #{tpu_custom_call.1} parent=35 // pred_check
          %p320 = pneg %p116
        $region46: #{tpu_custom_call.1} parent=35 // pred_check_branch
          %322 = sbr.rel (%p320) target = $region48
        $region47: #{tpu_custom_call.1} parent=35 // pred_region
          %323 = dma.done %s316, 2048
        $region48: #{tpu_custom_call.1} parent=35 // pred_fallthru
          _
        %s324 = sand.u32 %s51, 1
        %s325 = scalar_lea.sflag [#allocation3], %s324
        %s326 = sand.u32 %s51, 1
        %s327 = smul.addr %s326, 8
        %s328 = scalar_lea.vmem [#allocation2], %s327
        %p329 = pneg %p64
        %p330 = pneg %p61
        %s331 = sand.u32 %s29, 1
        %s332 = scalar_lea.sflag [#allocation6], %s331
        %s333 = sand.u32 %s77, 1
        %s334 = smul.addr %s333, 128
        %s335 = scalar_lea.vmem [#allocation5], %s334
        %p336 = pneg %p90
        %p337 = pneg %p87
        %s338 = sand.u32 %s29, 1
        %s339 = scalar_lea.sflag [#allocation6], %s338
        %s340 = sand.u32 %s103, 1
        %s341 = smul.addr %s340, 128
        %s342 = scalar_lea.vmem [#allocation7], %s341
        %p343 = pneg %p116
        %p344 = pneg %p113
        %p345 = scmp.lt.s32.totalorder %s33, 1
        %s346 = scalar_select %p345, %s33, 1
        %p347 = scmp.lt.s32.totalorder %s34, 0
        %s348 = scalar_select %p347, %s34, 0
        %s349 = sadd.s32 %s348, %s346
        %s350 = smul.addr %s349, 2
        %s351 = scalar_lea.vmem %s3, %s350
        %p352 = pneg %p144
        %p353 = pneg %p141
        %p354 = pneg %p172
        %p355 = pneg %p169
        %s356 = sand.u32 %s159, 1
        %s357 = scalar_lea.sflag [#allocation4], %s356
        %s358 = sand.u32 %s159, 1
        %s359 = smul.addr %s358, 8
        %s360 = scalar_lea.vmem [#allocation8], %s359
        %p361 = pneg %p200
        %p362 = pneg %p197
        %s363 = sand.u32 %s187, 1
        %s364 = scalar_lea.sflag [#allocation10], %s363
        %s365 = sand.u32 %s187, 1
        %s366 = smul.addr %s365, 8
        %s367 = scalar_lea.vmem [#allocation9], %s366
        %p368 = scmp.lt.s32.totalorder %s33, 1
        %s369 = scalar_select %p368, %s33, 1
        %p370 = scmp.lt.s32.totalorder %s34, 0
        %s371 = scalar_select %p370, %s34, 0
        %s372 = sadd.s32 %s371, %s369
        %s373 = smul.addr %s372, 2
        %s374 = scalar_lea.vmem %s3, %s373
        %v377 = vld [vmem:[%s301] sm:$0xff]
        %v378 = vld [vmem:[%s310] sm:$0xff]
        %v379 = vld [vmem:[%s310 + $0x8] sm:$0xff]
        %v380 = vld [vmem:[%s310 + $0x10] sm:$0xff]
        %v381 = vld [vmem:[%s310 + $0x18] sm:$0xff]
        %v382 = vld [vmem:[%s310 + $0x20] sm:$0xff]
        %v383 = vld [vmem:[%s310 + $0x28] sm:$0xff]
        %v384 = vld [vmem:[%s310 + $0x30] sm:$0xff]
        %v385 = vld [vmem:[%s310 + $0x38] sm:$0xff]
        %v386 = vld [vmem:[%s310 + $0x40] sm:$0xff]
        %v387 = vld [vmem:[%s310 + $0x48] sm:$0xff]
        %v388 = vld [vmem:[%s310 + $0x50] sm:$0xff]
        %v389 = vld [vmem:[%s310 + $0x58] sm:$0xff]
        %v390 = vld [vmem:[%s310 + $0x60] sm:$0xff]
        %v391 = vld [vmem:[%s310 + $0x68] sm:$0xff]
        %v392 = vld [vmem:[%s310 + $0x70] sm:$0xff]
        %v393 = vld [vmem:[%s310 + $0x78] sm:$0xff]
        %v394 = vld [vmem:[%s319] sm:$0xff]
        %v395 = vld [vmem:[%s319 + $0x8] sm:$0xff]
        %v396 = vld [vmem:[%s319 + $0x10] sm:$0xff]
        %v397 = vld [vmem:[%s319 + $0x18] sm:$0xff]
        %v398 = vld [vmem:[%s319 + $0x20] sm:$0xff]
        %v399 = vld [vmem:[%s319 + $0x28] sm:$0xff]
        %v400 = vld [vmem:[%s319 + $0x30] sm:$0xff]
        %v401 = vld [vmem:[%s319 + $0x38] sm:$0xff]
        %v402 = vld [vmem:[%s319 + $0x40] sm:$0xff]
        %v403 = vld [vmem:[%s319 + $0x48] sm:$0xff]
        %v404 = vld [vmem:[%s319 + $0x50] sm:$0xff]
        %v405 = vld [vmem:[%s319 + $0x58] sm:$0xff]
        %v406 = vld [vmem:[%s319 + $0x60] sm:$0xff]
        %v407 = vld [vmem:[%s319 + $0x68] sm:$0xff]
        %v408 = vld [vmem:[%s319 + $0x70] sm:$0xff]
        %v409 = vld [vmem:[%s319 + $0x78] sm:$0xff]
        %v410 = vld [vmem:[%s374] sm:$0x3]
        %411 = vmatprep.subr.mxu0 0.0
        %412 = vmatpush1.xpose.msra.mxu0 %v393
        %413 = vmatprep.subr.mxu0 0.0
        %414 = vmatpush1.xpose.msra.mxu0 %v392
        %415 = vmatprep.subr.mxu0 0.0
        %416 = vmatpush1.xpose.msra.mxu0 %v391
        %417 = vmatprep.subr.mxu0 0.0
        %418 = vmatpush1.xpose.msra.mxu0 %v390
        %419 = vmatprep.subr.mxu0 0.0
        %420 = vmatpush1.xpose.msra.mxu0 %v389
        %421 = vmatprep.subr.mxu0 0.0
        %422 = vmatpush1.xpose.msra.mxu0 %v388
        %423 = vmatprep.subr.mxu0 0.0
        %424 = vmatpush1.xpose.msra.mxu0 %v387
        %425 = vmatprep.subr.mxu0 0.0
        %426 = vmatpush1.xpose.msra.mxu0 %v386
        %427 = vmatprep.subr.mxu0 0.0
        %428 = vmatpush1.xpose.msra.mxu0 %v385
        %429 = vmatprep.subr.mxu0 0.0
        %430 = vmatpush1.xpose.msra.mxu0 %v384
        %431 = vmatprep.subr.mxu0 0.0
        %432 = vmatpush1.xpose.msra.mxu0 %v383
        %433 = vmatprep.subr.mxu0 0.0
        %434 = vmatpush1.xpose.msra.mxu0 %v382
        %435 = vmatprep.subr.mxu0 0.0
        %436 = vmatpush1.xpose.msra.mxu0 %v381
        %437 = vmatprep.subr.mxu0 0.0
        %438 = vmatpush1.xpose.msra.mxu0 %v380
        %439 = vmatprep.subr.mxu0 0.0
        %440 = vmatpush1.xpose.msra.mxu0 %v379
        %441 = vmatprep.subr.mxu0 0.0
        %442 = vmatpush1.xpose.msra.mxu0 %v378
        %443 = vmatprep.subr.mxu0 0.0
        %444 = vmatpush2.xpose.msra.mxu0 0.0
        %445 = vmatprep.subr.mxu0 0.0
        %446 = vmatpush2.xpose.msra.mxu0 0.0
        %447 = vmatprep.subr.mxu0 0.0
        %448 = vmatpush2.xpose.msra.mxu0 0.0
        %449 = vmatprep.subr.mxu0 0.0
        %450 = vmatpush2.xpose.msra.mxu0 0.0
        %451 = vmatprep.subr.mxu0 0.0
        %452 = vmatpush2.xpose.msra.mxu0 0.0
        %453 = vmatprep.subr.mxu0 0.0
        %454 = vmatpush2.xpose.msra.mxu0 0.0
        %455 = vmatprep.subr.mxu0 0.0
        %456 = vmatpush2.xpose.msra.mxu0 0.0
        %457 = vmatprep.subr.mxu0 0.0
        %458 = vmatpush2.xpose.msra.mxu0 0.0
        %459 = vmatprep.subr.mxu0 0.0
        %460 = vmatpush2.xpose.msra.mxu0 0.0
        %461 = vmatprep.subr.mxu0 0.0
        %462 = vmatpush2.xpose.msra.mxu0 0.0
        %463 = vmatprep.subr.mxu0 0.0
        %464 = vmatpush2.xpose.msra.mxu0 0.0
        %465 = vmatprep.subr.mxu0 0.0
        %466 = vmatpush2.xpose.msra.mxu0 0.0
        %467 = vmatprep.subr.mxu0 0.0
        %468 = vmatpush2.xpose.msra.mxu0 0.0
        %469 = vmatprep.subr.mxu0 0.0
        %470 = vmatpush2.xpose.msra.mxu0 0.0
        %471 = vmatprep.subr.mxu0 0.0
        %472 = vmatpush2.xpose.msra.mxu0 0.0
        %473 = vmatprep.subr.mxu0 0.0
        %474 = vmatpush2.xpose.msra.mxu0 0.0
        %475 = vmatprep.mubr.f32.mxu0 0.0
        %476 = vmatmul.mubr.f32.gmra.mxu0 %v377
        %v477 = vpop.f32.mrf.mxu0
        %v478 = vadd.f32 0.0, %v477
        %v479 = vpop.f32.mrf.mxu0
        %480 = vdwg.mxu0
        %vm481 = vnez %v410
        %v482 = vsel %vm481, 16843009, 0
        %v483 = vunpack.c.0.s8 %v482
        %vm484 = vcmp.ne.s32.totalorder %v483, 0
        %v485 = vsel %vm484, -inf, %v478
        %486 = vmax.xlane.f32.xlu0 %v485
        %v487 = vpop.xlane.xlu0 %486
        %v488 = vsub.f32 %v485, %v487
        %v489 = vmul.f32 %v488, 0.17677669
        %v490 = vmul.f32 %v489, 1.442695
        %v491 = vpow.pop %v490
        %492 = vadd.xlane.f32.xlu0 %v491
        %v493 = vpop.xlane.xlu0 %492
        %v494 = vrcp.pop %v493
        %v495 = vmul.f32 %v491, %v494
        %496 = vst [vmem:[%s367] sm:$0xff] %v495
        %497 = vmatprep.subr.mxu0 0.0
        %498 = vmatpush1.msra.mxu0 %v409
        %499 = vmatprep.subr.mxu0 0.0
        %500 = vmatpush1.msra.mxu0 %v408
        %501 = vmatprep.subr.mxu0 0.0
        %502 = vmatpush1.msra.mxu0 %v407
        %503 = vmatprep.subr.mxu0 0.0
        %504 = vmatpush1.msra.mxu0 %v406
        %505 = vmatprep.subr.mxu0 0.0
        %506 = vmatpush1.msra.mxu0 %v405
        %507 = vmatprep.subr.mxu0 0.0
        %508 = vmatpush1.msra.mxu0 %v404
        %509 = vmatprep.subr.mxu0 0.0
        %510 = vmatpush1.msra.mxu0 %v403
        %511 = vmatprep.subr.mxu0 0.0
        %512 = vmatpush1.msra.mxu0 %v402
        %513 = vmatprep.subr.mxu0 0.0
        %514 = vmatpush1.msra.mxu0 %v401
        %515 = vmatprep.subr.mxu0 0.0
        %516 = vmatpush1.msra.mxu0 %v400
        %517 = vmatprep.subr.mxu0 0.0
        %518 = vmatpush1.msra.mxu0 %v399
        %519 = vmatprep.subr.mxu0 0.0
        %520 = vmatpush1.msra.mxu0 %v398
        %521 = vmatprep.subr.mxu0 0.0
        %522 = vmatpush1.msra.mxu0 %v397
        %523 = vmatprep.subr.mxu0 0.0
        %524 = vmatpush1.msra.mxu0 %v396
        %525 = vmatprep.subr.mxu0 0.0
        %526 = vmatpush1.msra.mxu0 %v395
        %527 = vmatprep.subr.mxu0 0.0
        %528 = vmatpush1.msra.mxu0 %v394
        %529 = vmatprep.subr.mxu0 0.0
        %530 = vmatpush2.msra.mxu0 0.0
        %531 = vmatprep.subr.mxu0 0.0
        %532 = vmatpush2.msra.mxu0 0.0
        %533 = vmatprep.subr.mxu0 0.0
        %534 = vmatpush2.msra.mxu0 0.0
        %535 = vmatprep.subr.mxu0 0.0
        %536 = vmatpush2.msra.mxu0 0.0
        %537 = vmatprep.subr.mxu0 0.0
        %538 = vmatpush2.msra.mxu0 0.0
        %539 = vmatprep.subr.mxu0 0.0
        %540 = vmatpush2.msra.mxu0 0.0
        %541 = vmatprep.subr.mxu0 0.0
        %542 = vmatpush2.msra.mxu0 0.0
        %543 = vmatprep.subr.mxu0 0.0
        %544 = vmatpush2.msra.mxu0 0.0
        %545 = vmatprep.subr.mxu0 0.0
        %546 = vmatpush2.msra.mxu0 0.0
        %547 = vmatprep.subr.mxu0 0.0
        %548 = vmatpush2.msra.mxu0 0.0
        %549 = vmatprep.subr.mxu0 0.0
        %550 = vmatpush2.msra.mxu0 0.0
        %551 = vmatprep.subr.mxu0 0.0
        %552 = vmatpush2.msra.mxu0 0.0
        %553 = vmatprep.subr.mxu0 0.0
        %554 = vmatpush2.msra.mxu0 0.0
        %555 = vmatprep.subr.mxu0 0.0
        %556 = vmatpush2.msra.mxu0 0.0
        %557 = vmatprep.subr.mxu0 0.0
        %558 = vmatpush2.msra.mxu0 0.0
        %559 = vmatprep.subr.mxu0 0.0
        %560 = vmatpush2.msra.mxu0 0.0
        %561 = vmatprep.mubr.f32.mxu0 0.0
        %562 = vmatmul.mubr.f32.gmra.mxu0 %v495
        %v563 = vpop.f32.mrf.mxu0
        %v564 = vadd.f32 0.0, %v563
        %v565 = vpop.f32.mrf.mxu0
        %566 = vdwg.mxu0
        %567 = vst [vmem:[%s360] sm:$0xff] %v564
        %s568 = sand.u32 %s159, 1
        %s569 = scalar_lea.sflag [#allocation4], %s568
        %s570 = sand.u32 %s159, 1
        %s571 = smul.addr %s570, 8
        %s572 = scalar_lea.vmem [#allocation8], %s571
        %s573 = sand.u32 %s187, 1
        %s574 = scalar_lea.sflag [#allocation10], %s573
        %s575 = sand.u32 %s187, 1
        %s576 = smul.addr %s575, 8
        %s577 = scalar_lea.vmem [#allocation9], %s576
        // Predicated region
        $region49: #{tpu_custom_call.1} parent=35 // pred_check
          %p578 = pneg %p169
        $region50: #{tpu_custom_call.1} parent=35 // pred_check_branch
          %580 = sbr.rel (%p578) target = $region52
        $region51: #{tpu_custom_call.1} parent=35 // pred_region
          %s582 = ssub.s32 128, 128
          %583 = vsyncadd %s569, %s582
          %s584 = sadd.s32 %s34, %s33
          %s585 = smul.addr %s584, 128
          %s586 = scalar_lea.hbm %s4, %s585
          %s588 = sshll.u32 %s572, 4
          %s589 = int_to_ptr.vmem [resolvable:$true] %s588
          %591 = dma.vmem_to_hbm [thread:$0]  %s589, 128, %s586, %s569
        $region52: #{tpu_custom_call.1} parent=35 // pred_fallthru
          _
        // Predicated region
        $region53: #{tpu_custom_call.1} parent=35 // pred_check
          %p592 = pneg %p197
        $region54: #{tpu_custom_call.1} parent=35 // pred_check_branch
          %594 = sbr.rel (%p592) target = $region56
        $region55: #{tpu_custom_call.1} parent=35 // pred_region
          %s596 = ssub.s32 128, 128
          %597 = vsyncadd %s574, %s596
          %s598 = sadd.s32 %s34, %s33
          %s599 = smul.addr %s598, 128
          %s600 = scalar_lea.hbm %s5, %s599
          %s602 = sshll.u32 %s577, 4
          %s603 = int_to_ptr.vmem [resolvable:$true] %s602
          %605 = dma.vmem_to_hbm [thread:$0]  %s603, 128, %s600, %s574
        $region56: #{tpu_custom_call.1} parent=35 // pred_fallthru
          _
      $region36: #{tpu_custom_call.1} parent=5 // pred_fallthru
        _
      %p606 = scmp.le.s32.totalorder 2, %s24
      // Predicated region
      $region57: #{tpu_custom_call.1} parent=5 // pred_check
        %p607 = pneg %p606
      $region58: #{tpu_custom_call.1} parent=5 // pred_check_branch
        %609 = sbr.rel (%p607) target = $region60
      $region59: #{tpu_custom_call.1} parent=5 // pred_region
        %s610 = ssub.s32 %s24, 2
        // Predicated region
        $region61: #{tpu_custom_call.1} parent=59 // pred_check
          %p611 = pneg %p175
        $region62: #{tpu_custom_call.1} parent=59 // pred_check_branch
          %613 = sbr.rel (%p611) target = $region64
        $region63: #{tpu_custom_call.1} parent=59 // pred_region
          %s614 = sand.u32 %s160, 1
          %s615 = scalar_lea.sflag [#allocation4], %s614
          %s616 = sand.u32 %s160, 1
          %s617 = smul.addr %s616, 8
          %s618 = scalar_lea.vmem [#allocation8], %s617
          %619 = dma.done %s615, 128
        $region64: #{tpu_custom_call.1} parent=59 // pred_fallthru
          _
        // Predicated region
        $region65: #{tpu_custom_call.1} parent=59 // pred_check
          %p620 = pneg %p203
        $region66: #{tpu_custom_call.1} parent=59 // pred_check_branch
          %622 = sbr.rel (%p620) target = $region68
        $region67: #{tpu_custom_call.1} parent=59 // pred_region
          %s623 = sand.u32 %s188, 1
          %s624 = scalar_lea.sflag [#allocation10], %s623
          %s625 = sand.u32 %s188, 1
          %s626 = smul.addr %s625, 8
          %s627 = scalar_lea.vmem [#allocation9], %s626
          %628 = dma.done %s624, 128
        $region68: #{tpu_custom_call.1} parent=59 // pred_fallthru
          _
      $region60: #{tpu_custom_call.1} parent=5 // pred_fallthru
        _
    $region6: #{tpu_custom_call.1} parent=1 // loop_footer
      %s28 = sadd.s32 1, %s24
    $region7: #{tpu_custom_call.1} parent=1 // loop_footer_branch
      %23 = sbr.rel target = $region3
    $region8: #{tpu_custom_call.1} parent=1 // loop_exit
      _
    %629 = vsyncpa [#allocation3], 1
    %s630 = scalar_lea.sflag [#allocation3], 1
    %631 = vsyncpa %s630, 1
    %632 = vsyncpa [#allocation6], 1
    %s633 = scalar_lea.sflag [#allocation6], 1
    %634 = vsyncpa %s633, 1
    %635 = vsyncpa [#allocation4], 1
    %s636 = scalar_lea.sflag [#allocation4], 1
    %637 = vsyncpa %s636, 1
    %638 = vsyncpa [#allocation10], 1
    %s639 = scalar_lea.sflag [#allocation10], 1
    %640 = vsyncpa %s639, 1

</llo_original>
